<compile_context>
chip_gen: v7x
topology: tpu7x:2x2x1
jax: 0.10.0
libtpu: 0.0.40
codegen_flags: <defaults>
</compile_context>

<pallas_src>
import jax
import jax.numpy as jnp
import numpy as np
from jax.experimental import pallas as pl
from jax.experimental.pallas import tpu as pltpu

BN_EPS = 1e-5


def _make_fused_block_kernel(R, L, margin, inv_n):
    """Fused BN->ReLU->conv3x3 twice + residual on lane-dense (R, L) rows."""

    def kernel(x_ref, rmask_ref, gb_ref, p_ref, w1_ref, w2_ref, out_ref, scr_ref):
        x = x_ref[...]                       # (R, L) f32, zero at all pad positions
        rmask = rmask_ref[...]               # (R, 1)  f32, zero at h-pad rows
        p = p_ref[...]                       # (L, L)  f32 channel projector

        # Zero only the two halo rows read by the +/-1 shifted taps.  Done once:
        # the interior rows [margin, margin+R) are fully overwritten by each
        # staging store, so the halos stay zero for both convs.
        zero_row = jnp.zeros((1, L), jnp.float32)
        scr_ref[pl.ds(margin - 1, 1), :] = zero_row
        scr_ref[pl.ds(margin + R, 1), :] = zero_row

        def folded_bn(v_masked, g_lane, b_lane):
            # Train-mode BN folded into per-lane scale/shift.
            # v_masked is zero at pad rows; pad lanes are excluded because P's
            # rows/cols are zero there AND g_lane/b_lane are zero there, so
            # scale/shift come out exactly zero on every pad lane (the conv then
            # sees exact zero padding).  Stats matmuls stay f32 for accuracy.
            sums = jnp.sum(jnp.dot(v_masked, p, preferred_element_type=jnp.float32),
                           axis=0, keepdims=True)                        # (1, L)
            sqs = jnp.sum(jnp.dot(v_masked * v_masked, p,
                                  preferred_element_type=jnp.float32),
                          axis=0, keepdims=True)                         # (1, L)
            mean_l = sums * inv_n
            var_l = sqs * inv_n - mean_l * mean_l
            scale_l = g_lane * jax.lax.rsqrt(var_l + BN_EPS)
            shift_l = b_lane - mean_l * scale_l
            return scale_l, shift_l

        def conv3x3(h, w_ref):
            # Stage h with a one-row zero halo, build the K-concatenated LHS
            # [h[r-1] | h[r] | h[r+1]] and run ONE bf16 MXU matmul with K = 3L
            # (f32 accumulation).  All three kw taps live inside the banded
            # (3L, L) weight matrix, so only the +/-1 row shift remains here.
            scr_ref[pl.ds(margin, R), :] = h
            prev = scr_ref[pl.ds(margin - 1, R), :]          # h[r-1] (0 at r=0)
            nxt = scr_ref[pl.ds(margin + 1, R), :]           # h[r+1] (0 at r=R-1)
            lhs = jnp.concatenate([prev, h, nxt], axis=-1).astype(jnp.bfloat16)
            return jnp.dot(lhs, w_ref[...], preferred_element_type=jnp.float32)

        # ---- BN1 -> ReLU -> conv1 ----  (x is already zero at pad positions)
        sc1, sh1 = folded_bn(x, gb_ref[pl.ds(0, 1), :], gb_ref[pl.ds(1, 1), :])
        h1 = jnp.maximum(x * sc1 + sh1, 0.0) * rmask
        y1 = conv3x3(h1, w1_ref)

        # ---- BN2 (stats over interior positions only) -> ReLU -> conv2 ----
        sc2, sh2 = folded_bn(y1 * rmask, gb_ref[pl.ds(2, 1), :], gb_ref[pl.ds(3, 1), :])
        h2 = jnp.maximum(y1 * sc2 + sh2, 0.0) * rmask
        y2 = conv3x3(h2, w2_ref)

        # ---- residual add (free: x already in VMEM) ----
        out_ref[...] = y2 + x

    return kernel


def preact_resnet_block(x_nchw, params):
    """PreActResNetBlock(c_in, nn.ReLU, subsample=False) forward (train-mode BN)."""
    g1, b1, w1, g2, b2, w2 = params
    N, C, H, W = x_nchw.shape
    Hp, Wp = H + 2, W + 2
    R = N * Hp                                   # rows (sublane axis)
    L = pl.cdiv(Wp * C, 128) * 128               # lanes, padded to a 128 multiple
    MARGIN = 8                                   # halo; keeps the big store aligned

    x32 = x_nchw.astype(jnp.float32)

    # ---- lane-dense re-pack: (N,C,H,W) -> (N*(H+2), (W+2)*C) zero padded ----
    x_rows = jnp.transpose(x32, (0, 2, 3, 1))                       # NHWC
    x_rows = jnp.pad(x_rows, ((0, 0), (1, 1), (1, 1), (0, 0)))      # spatial pad
    x_rows = x_rows.reshape(R, Wp * C)
    x_rows = jnp.pad(x_rows, ((0, 0), (0, L - Wp * C)))             # (R, L)

    # ---- compile-time constants (numpy; no per-call XLA op chains) ----
    rmask_np = np.pad(np.ones((N, H), np.float32), ((0, 0), (1, 1))).reshape(R, 1)
    lane_ch = np.full((L,), -1, np.int64)        # lane -> channel (-1 on pad lanes)
    for w in range(1, W + 1):
        lane_ch[w * C:(w + 1) * C] = np.arange(C)
    valid = lane_ch >= 0
    # channel projector: P[l, l'] = 1 iff both lanes valid and same channel
    p_np = ((lane_ch[:, None] == lane_ch[None, :]) & valid[:, None]).astype(np.float32)
    # channel -> masked-lane expansion: E[c, l] = 1 iff lane l valid and maps to c
    e_np = (lane_ch[None, :] == np.arange(C)[:, None]).astype(np.float32)
    # shifted eyes folding the three kw taps into banded lane matrices
    eye3_np = np.stack([np.eye(Wp, k=-(kw - 1)) for kw in range(3)]).astype(np.float32)

    rmask = jnp.asarray(rmask_np)
    p_mat = jnp.asarray(p_np)
    e_mat = jnp.asarray(e_np)
    eye3 = jnp.asarray(eye3_np)

    # gamma/beta -> per-lane, column-masked: one tiny matmul for all four vectors
    gb_lane = jnp.stack([g1, b1, g2, b2]).astype(jnp.float32) @ e_mat    # (4, L)

    def band_weights(w_oihw):
        """OIHW 3x3 -> (3L, L) bf16 stacked banded lane matrices (kh-major).

        w_cat[kh*L + w_in*C + ci, w_out*C + co] = w[co, ci, kh, (w_in - w_out) + 1],
        built with a single einsum against the constant shifted-eye tensor.
        """
        band = jnp.einsum('kab,oihk->haibo', eye3, w_oihw.astype(jnp.float32))
        band = band.reshape(3, Wp * C, Wp * C)
        band = jnp.pad(band, ((0, 0), (0, L - Wp * C), (0, L - Wp * C)))
        return band.reshape(3 * L, L).astype(jnp.bfloat16)

    w1_cat = band_weights(w1)
    w2_cat = band_weights(w2)

    vmem = pl.BlockSpec(memory_space=pltpu.MemorySpace.VMEM)
    flops = (2 * (2 * R * (3 * L) * L)          # two K=3L conv matmuls
             + 4 * (2 * R * L * L)              # four BN-stat matmuls
             + 24 * R * L)                      # elementwise passes
    bytes_acc = (4 * R * L * 2                  # x in, out
                 + 2 * (2 * 3 * L * L)          # bf16 weights
                 + 4 * L * L + 4 * 4 * L + 4 * R)
    cost = pl.CostEstimate(flops=int(flops), transcendentals=int(2 * L),
                           bytes_accessed=int(bytes_acc))

    out_rows = pl.pallas_call(
        _make_fused_block_kernel(R, L, MARGIN, 1.0 / float(N * H * W)),
        out_shape=jax.ShapeDtypeStruct((R, L), jnp.float32),
        in_specs=[vmem] * 6,
        out_specs=vmem,
        scratch_shapes=[pltpu.VMEM((2 * MARGIN + R, L), jnp.float32)],
        cost_estimate=cost,
    )(x_rows, rmask, gb_lane, p_mat, w1_cat, w2_cat)

    # unpack lane-dense rows back to NCHW (interior positions only)
    out = out_rows[:, :Wp * C].reshape(N, Hp, Wp, C)[:, 1:H + 1, 1:W + 1, :]
    return jnp.transpose(out, (0, 3, 1, 2))


def reference_block(x, params):
    """Pure-JAX reference matching the torch forward (train-mode BN, ReLU)."""
    g1, b1, w1, g2, b2, w2 = params

    def bn(v, g, b):
        mu = jnp.mean(v, axis=(0, 2, 3), keepdims=True)
        var = jnp.mean((v - mu) ** 2, axis=(0, 2, 3), keepdims=True)
        return ((v - mu) * jax.lax.rsqrt(var + BN_EPS)
                * g.reshape(1, -1, 1, 1) + b.reshape(1, -1, 1, 1))

    def conv(v, w):
        return jax.lax.conv_general_dilated(
            v, w, window_strides=(1, 1), padding=((1, 1), (1, 1)),
            dimension_numbers=('NCHW', 'OIHW', 'NCHW'))

    z = conv(jnp.maximum(bn(x, g1, b1), 0.0), w1)
    z = conv(jnp.maximum(bn(z, g2, b2), 0.0), w2)
    return z + x


if __name__ == "__main__":
    key = jax.random.PRNGKey(0)
    N, C, H, W = 2, 4, 16, 16           # c_in = c_out = 4, subsample=False
    ks = jax.random.split(key, 7)

    x = jax.random.normal(ks[0], (N, C, H, W), jnp.float32)
    g1 = 1.0 + 0.1 * jax.random.normal(ks[1], (C,), jnp.float32)
    b1 = 0.1 * jax.random.normal(ks[2], (C,), jnp.float32)
    w1 = 0.2 * jax.random.normal(ks[3], (C, C, 3, 3), jnp.float32)   # OIHW
    g2 = 1.0 + 0.1 * jax.random.normal(ks[4], (C,), jnp.float32)
    b2 = 0.1 * jax.random.normal(ks[5], (C,), jnp.float32)
    w2 = 0.2 * jax.random.normal(ks[6], (C, C, 3, 3), jnp.float32)   # OIHW
    params = (g1, b1, w1, g2, b2, w2)

    out = jax.block_until_ready(jax.jit(preact_resnet_block)(x, params))
    ref = reference_block(x, params)
    # Tolerance reflects bf16 inputs at the MXU (f32 accumulation); structural
    # bugs would show errors >= 1e-1.
    np.testing.assert_allclose(np.asarray(out), np.asarray(ref),
                               rtol=3e-2, atol=3e-2)
    print("KERNEL_OK")
</pallas_src>

<mosaic_0001>
module attributes {stable_mosaic.version = 11 : i64} {
  func.func @kernel(%arg0: memref<36x128xf32, #tpu.memory_space<vmem>>, %arg1: memref<36x1xf32, #tpu.memory_space<vmem>>, %arg2: memref<4x128xf32, #tpu.memory_space<vmem>>, %arg3: memref<128x128xf32, #tpu.memory_space<vmem>>, %arg4: memref<384x128xbf16, #tpu.memory_space<vmem>>, %arg5: memref<384x128xbf16, #tpu.memory_space<vmem>>, %arg6: memref<36x128xf32, #tpu.memory_space<vmem>>, %arg7: memref<52x128xf32, #tpu.memory_space<vmem>>) attributes {dimension_semantics = [], scalar_prefetch = 0 : i64, scratch_operands = 1 : i64, tpu.core_type = #tpu.core_type<tc>} {
    %c0 = arith.constant 0 : index
    %c0_0 = arith.constant 0 : index
    %0 = vector.load %arg0[%c0, %c0_0] : memref<36x128xf32, #tpu.memory_space<vmem>>, vector<36x128xf32>
    %c0_1 = arith.constant 0 : index
    %c0_2 = arith.constant 0 : index
    %1 = vector.load %arg1[%c0_1, %c0_2] : memref<36x1xf32, #tpu.memory_space<vmem>>, vector<36x1xf32>
    %c0_3 = arith.constant 0 : index
    %c0_4 = arith.constant 0 : index
    %2 = vector.load %arg3[%c0_3, %c0_4] : memref<128x128xf32, #tpu.memory_space<vmem>>, vector<128x128xf32>
    %cst = arith.constant 0.000000e+00 : f32
    %3 = vector.broadcast %cst : f32 to vector<1x128xf32>
    %c7 = arith.constant 7 : index
    %c0_5 = arith.constant 0 : index
    %4 = vector.load %arg7[%c7, %c0_5] : memref<52x128xf32, #tpu.memory_space<vmem>>, vector<1x128xf32>
    tpu.vector_store %arg7[%c7, %c0_5], %3 {strides = array<i32>} : memref<52x128xf32, #tpu.memory_space<vmem>>, vector<1x128xf32>,
    %c44 = arith.constant 44 : index
    %c0_6 = arith.constant 0 : index
    %5 = vector.load %arg7[%c44, %c0_6] : memref<52x128xf32, #tpu.memory_space<vmem>>, vector<1x128xf32>
    tpu.vector_store %arg7[%c44, %c0_6], %3 {strides = array<i32>} : memref<52x128xf32, #tpu.memory_space<vmem>>, vector<1x128xf32>,
    %c0_7 = arith.constant 0 : index
    %c0_8 = arith.constant 0 : index
    %6 = vector.load %arg2[%c0_7, %c0_8] : memref<4x128xf32, #tpu.memory_space<vmem>>, vector<1x128xf32>
    %c1 = arith.constant 1 : index
    %c0_9 = arith.constant 0 : index
    %7 = vector.load %arg2[%c1, %c0_9] : memref<4x128xf32, #tpu.memory_space<vmem>>, vector<1x128xf32>
    %cst_10 = arith.constant dense<0.000000e+00> : vector<36x128xf32>
    %8 = tpu.matmul %0, %2, %cst_10 {dimension_numbers = #tpu.dot_dimension_numbers<[1], [0], [0], [1], [0, 0, 1, 1], [], []>} : vector<36x128xf32>, vector<128x128xf32>, vector<36x128xf32> -> vector<36x128xf32>
    %cst_11 = arith.constant dense<0.000000e+00> : vector<128xf32>
    %9 = vector.multi_reduction <add>, %8, %cst_11 [0] : vector<36x128xf32> to vector<128xf32>
    %10 = vector.shape_cast %9 : vector<128xf32> to vector<1x128xf32>
    %11 = arith.mulf %0, %0 : vector<36x128xf32>
    %cst_12 = arith.constant dense<0.000000e+00> : vector<36x128xf32>
    %12 = tpu.matmul %11, %2, %cst_12 {dimension_numbers = #tpu.dot_dimension_numbers<[1], [0], [0], [1], [0, 0, 1, 1], [], []>} : vector<36x128xf32>, vector<128x128xf32>, vector<36x128xf32> -> vector<36x128xf32>
    %cst_13 = arith.constant dense<0.000000e+00> : vector<128xf32>
    %13 = vector.multi_reduction <add>, %12, %cst_13 [0] : vector<36x128xf32> to vector<128xf32>
    %14 = vector.shape_cast %13 : vector<128xf32> to vector<1x128xf32>
    %cst_14 = arith.constant 0.001953125 : f32
    %15 = vector.broadcast %cst_14 : f32 to vector<1x128xf32>
    %16 = arith.mulf %10, %15 : vector<1x128xf32>
    %cst_15 = arith.constant 0.001953125 : f32
    %17 = vector.broadcast %cst_15 : f32 to vector<1x128xf32>
    %18 = arith.mulf %14, %17 : vector<1x128xf32>
    %19 = arith.mulf %16, %16 : vector<1x128xf32>
    %20 = arith.subf %18, %19 : vector<1x128xf32>
    %cst_16 = arith.constant 9.99999974E-6 : f32
    %21 = vector.broadcast %cst_16 : f32 to vector<1x128xf32>
    %22 = arith.addf %20, %21 : vector<1x128xf32>
    %23 = math.rsqrt %22 : vector<1x128xf32>
    %24 = arith.mulf %6, %23 : vector<1x128xf32>
    %25 = arith.mulf %16, %24 : vector<1x128xf32>
    %26 = arith.subf %7, %25 : vector<1x128xf32>
    %27 = vector.broadcast %24 : vector<1x128xf32> to vector<36x128xf32>
    %28 = arith.mulf %0, %27 : vector<36x128xf32>
    %29 = vector.broadcast %26 : vector<1x128xf32> to vector<36x128xf32>
    %30 = arith.addf %28, %29 : vector<36x128xf32>
    %cst_17 = arith.constant 0.000000e+00 : f32
    %31 = vector.broadcast %cst_17 : f32 to vector<36x128xf32>
    %32 = arith.maximumf %30, %31 : vector<36x128xf32>
    %33 = vector.broadcast %1 : vector<36x1xf32> to vector<36x128xf32>
    %34 = arith.mulf %32, %33 : vector<36x128xf32>
    %c8 = arith.constant 8 : index
    %c0_18 = arith.constant 0 : index
    %35 = vector.load %arg7[%c8, %c0_18] : memref<52x128xf32, #tpu.memory_space<vmem>>, vector<36x128xf32>
    tpu.vector_store %arg7[%c8, %c0_18], %34 {strides = array<i32>} : memref<52x128xf32, #tpu.memory_space<vmem>>, vector<36x128xf32>,
    %c7_19 = arith.constant 7 : index
    %c0_20 = arith.constant 0 : index
    %36 = vector.load %arg7[%c7_19, %c0_20] : memref<52x128xf32, #tpu.memory_space<vmem>>, vector<36x128xf32>
    %c9 = arith.constant 9 : index
    %c0_21 = arith.constant 0 : index
    %37 = vector.load %arg7[%c9, %c0_21] : memref<52x128xf32, #tpu.memory_space<vmem>>, vector<36x128xf32>
    %38 = tpu.concatenate %36, %34, %37 in 1 : vector<36x128xf32>, vector<36x128xf32>, vector<36x128xf32> -> vector<36x384xf32>
    %39 = arith.truncf %38 : vector<36x384xf32> to vector<36x384xbf16>
    %c0_22 = arith.constant 0 : index
    %c0_23 = arith.constant 0 : index
    %40 = vector.load %arg4[%c0_22, %c0_23] : memref<384x128xbf16, #tpu.memory_space<vmem>>, vector<384x128xbf16>
    %cst_24 = arith.constant dense<0.000000e+00> : vector<36x128xf32>
    %41 = tpu.matmul %39, %40, %cst_24 {dimension_numbers = #tpu.dot_dimension_numbers<[1], [0], [0], [1], [0, 0, 1, 1], [], []>} : vector<36x384xbf16>, vector<384x128xbf16>, vector<36x128xf32> -> vector<36x128xf32>
    %42 = vector.broadcast %1 : vector<36x1xf32> to vector<36x128xf32>
    %43 = arith.mulf %41, %42 : vector<36x128xf32>
    %c2 = arith.constant 2 : index
    %c0_25 = arith.constant 0 : index
    %44 = vector.load %arg2[%c2, %c0_25] : memref<4x128xf32, #tpu.memory_space<vmem>>, vector<1x128xf32>
    %c3 = arith.constant 3 : index
    %c0_26 = arith.constant 0 : index
    %45 = vector.load %arg2[%c3, %c0_26] : memref<4x128xf32, #tpu.memory_space<vmem>>, vector<1x128xf32>
    %cst_27 = arith.constant dense<0.000000e+00> : vector<36x128xf32>
    %46 = tpu.matmul %43, %2, %cst_27 {dimension_numbers = #tpu.dot_dimension_numbers<[1], [0], [0], [1], [0, 0, 1, 1], [], []>} : vector<36x128xf32>, vector<128x128xf32>, vector<36x128xf32> -> vector<36x128xf32>
    %cst_28 = arith.constant dense<0.000000e+00> : vector<128xf32>
    %47 = vector.multi_reduction <add>, %46, %cst_28 [0] : vector<36x128xf32> to vector<128xf32>
    %48 = vector.shape_cast %47 : vector<128xf32> to vector<1x128xf32>
    %49 = arith.mulf %43, %43 : vector<36x128xf32>
    %cst_29 = arith.constant dense<0.000000e+00> : vector<36x128xf32>
    %50 = tpu.matmul %49, %2, %cst_29 {dimension_numbers = #tpu.dot_dimension_numbers<[1], [0], [0], [1], [0, 0, 1, 1], [], []>} : vector<36x128xf32>, vector<128x128xf32>, vector<36x128xf32> -> vector<36x128xf32>
    %cst_30 = arith.constant dense<0.000000e+00> : vector<128xf32>
    %51 = vector.multi_reduction <add>, %50, %cst_30 [0] : vector<36x128xf32> to vector<128xf32>
    %52 = vector.shape_cast %51 : vector<128xf32> to vector<1x128xf32>
    %cst_31 = arith.constant 0.001953125 : f32
    %53 = vector.broadcast %cst_31 : f32 to vector<1x128xf32>
    %54 = arith.mulf %48, %53 : vector<1x128xf32>
    %cst_32 = arith.constant 0.001953125 : f32
    %55 = vector.broadcast %cst_32 : f32 to vector<1x128xf32>
    %56 = arith.mulf %52, %55 : vector<1x128xf32>
    %57 = arith.mulf %54, %54 : vector<1x128xf32>
    %58 = arith.subf %56, %57 : vector<1x128xf32>
    %cst_33 = arith.constant 9.99999974E-6 : f32
    %59 = vector.broadcast %cst_33 : f32 to vector<1x128xf32>
    %60 = arith.addf %58, %59 : vector<1x128xf32>
    %61 = math.rsqrt %60 : vector<1x128xf32>
    %62 = arith.mulf %44, %61 : vector<1x128xf32>
    %63 = arith.mulf %54, %62 : vector<1x128xf32>
    %64 = arith.subf %45, %63 : vector<1x128xf32>
    %65 = vector.broadcast %62 : vector<1x128xf32> to vector<36x128xf32>
    %66 = arith.mulf %41, %65 : vector<36x128xf32>
    %67 = vector.broadcast %64 : vector<1x128xf32> to vector<36x128xf32>
    %68 = arith.addf %66, %67 : vector<36x128xf32>
    %cst_34 = arith.constant 0.000000e+00 : f32
    %69 = vector.broadcast %cst_34 : f32 to vector<36x128xf32>
    %70 = arith.maximumf %68, %69 : vector<36x128xf32>
    %71 = vector.broadcast %1 : vector<36x1xf32> to vector<36x128xf32>
    %72 = arith.mulf %70, %71 : vector<36x128xf32>
    %c8_35 = arith.constant 8 : index
    %c0_36 = arith.constant 0 : index
    %73 = vector.load %arg7[%c8_35, %c0_36] : memref<52x128xf32, #tpu.memory_space<vmem>>, vector<36x128xf32>
    tpu.vector_store %arg7[%c8_35, %c0_36], %72 {strides = array<i32>} : memref<52x128xf32, #tpu.memory_space<vmem>>, vector<36x128xf32>,
    %c7_37 = arith.constant 7 : index
    %c0_38 = arith.constant 0 : index
    %74 = vector.load %arg7[%c7_37, %c0_38] : memref<52x128xf32, #tpu.memory_space<vmem>>, vector<36x128xf32>
    %c9_39 = arith.constant 9 : index
    %c0_40 = arith.constant 0 : index
    %75 = vector.load %arg7[%c9_39, %c0_40] : memref<52x128xf32, #tpu.memory_space<vmem>>, vector<36x128xf32>
    %76 = tpu.concatenate %74, %72, %75 in 1 : vector<36x128xf32>, vector<36x128xf32>, vector<36x128xf32> -> vector<36x384xf32>
    %77 = arith.truncf %76 : vector<36x384xf32> to vector<36x384xbf16>
    %c0_41 = arith.constant 0 : index
    %c0_42 = arith.constant 0 : index
    %78 = vector.load %arg5[%c0_41, %c0_42] : memref<384x128xbf16, #tpu.memory_space<vmem>>, vector<384x128xbf16>
    %cst_43 = arith.constant dense<0.000000e+00> : vector<36x128xf32>
    %79 = tpu.matmul %77, %78, %cst_43 {dimension_numbers = #tpu.dot_dimension_numbers<[1], [0], [0], [1], [0, 0, 1, 1], [], []>} : vector<36x384xbf16>, vector<384x128xbf16>, vector<36x128xf32> -> vector<36x128xf32>
    %80 = arith.addf %79, %0 : vector<36x128xf32>
    %c0_44 = arith.constant 0 : index
    %c0_45 = arith.constant 0 : index
    %81 = vector.load %arg6[%c0_44, %c0_45] : memref<36x128xf32, #tpu.memory_space<vmem>>, vector<36x128xf32>
    tpu.vector_store %arg6[%c0_44, %c0_45], %80 {strides = array<i32>} : memref<36x128xf32, #tpu.memory_space<vmem>>, vector<36x128xf32>,
    return
  }
}

</mosaic_0001>

<llo_original>
// kernel: preact_resnet_block.1
$region0: #{preact_resnet_block.1}
  #allocation0 [shape = 'u32[]', space=smem, size = 0x4, offset = 0x4, fixed_abs, tag = 'smem constant byte address 0x4 - core index']
  #allocation1 [shape = 'u32[144,128]{1,0:T(1,128)}', space=vmem, size = 0x12000, scoped, tag = 'internal scratch']
  #allocation2 [shape = 'f32[52,128]{1,0:T(8,128)}', space=vmem, size = 0x7000, scoped, tag = 'scratch operand']
  %s0 = inlined_call_operand.vmem [shape: f32[36,128], index: 0, kind: input, shape index: {}]
  %s1 = inlined_call_operand.vmem [shape: f32[36,1], index: 1, kind: input, shape index: {}]
  %s2 = inlined_call_operand.vmem [shape: f32[4,128], index: 2, kind: input, shape index: {}]
  %s3 = inlined_call_operand.vmem [shape: f32[128,128], index: 3, kind: input, shape index: {}]
  %s4 = inlined_call_operand.vmem [shape: bf16[384,128], index: 4, kind: input, shape index: {}]
  %s5 = inlined_call_operand.vmem [shape: bf16[384,128], index: 5, kind: input, shape index: {}]
  %s6 = inlined_call_operand.vmem [shape: f32[36,128], index: 6, kind: output, shape index: {}]
  %s7 = sld [smem:[#allocation0]]
  $region34: #{preact_resnet_block.1} parent=0
    _
  %s9 = ssub.s32 1, %s7
  %s10 = scalar_select 0, %s9, %s7
  // Predicated region
  $region2: #{preact_resnet_block.1} parent=0 // pred_check
    _
  $region3: #{preact_resnet_block.1} parent=0 // pred_check_branch
    %12 = sbr.rel (0) target = $region5
  $region4: #{preact_resnet_block.1} parent=0 // pred_region
    _
  $region5: #{preact_resnet_block.1} parent=0 // pred_fallthru
    _
  // Predicated region
  $region6: #{preact_resnet_block.1} parent=0 // pred_check
    _
  $region7: #{preact_resnet_block.1} parent=0 // pred_check_branch
    %14 = sbr.rel (0) target = $region9
  $region8: #{preact_resnet_block.1} parent=0 // pred_region
    _
  $region9: #{preact_resnet_block.1} parent=0 // pred_fallthru
    _
  // Predicated region
  $region10: #{preact_resnet_block.1} parent=0 // pred_check
    _
  $region11: #{preact_resnet_block.1} parent=0 // pred_check_branch
    %16 = sbr.rel (0) target = $region13
  $region12: #{preact_resnet_block.1} parent=0 // pred_region
    _
  $region13: #{preact_resnet_block.1} parent=0 // pred_fallthru
    _
  // Predicated region
  $region14: #{preact_resnet_block.1} parent=0 // pred_check
    _
  $region15: #{preact_resnet_block.1} parent=0 // pred_check_branch
    %18 = sbr.rel (0) target = $region17
  $region16: #{preact_resnet_block.1} parent=0 // pred_region
    _
  $region17: #{preact_resnet_block.1} parent=0 // pred_fallthru
    _
  // Predicated region
  $region18: #{preact_resnet_block.1} parent=0 // pred_check
    _
  $region19: #{preact_resnet_block.1} parent=0 // pred_check_branch
    %20 = sbr.rel (0) target = $region21
  $region20: #{preact_resnet_block.1} parent=0 // pred_region
    _
  $region21: #{preact_resnet_block.1} parent=0 // pred_fallthru
    _
  // Predicated region
  $region22: #{preact_resnet_block.1} parent=0 // pred_check
    _
  $region23: #{preact_resnet_block.1} parent=0 // pred_check_branch
    %22 = sbr.rel (0) target = $region25
  $region24: #{preact_resnet_block.1} parent=0 // pred_region
    _
  $region25: #{preact_resnet_block.1} parent=0 // pred_fallthru
    _
  %v24 = vld [vmem:[%s0] sm:$0xff]
  %v25 = vld [vmem:[%s0 + $0x8] sm:$0xff]
  %v26 = vld [vmem:[%s0 + $0x10] sm:$0xff]
  %v27 = vld [vmem:[%s0 + $0x18] sm:$0xff]
  %v28 = vld [vmem:[%s0 + $0x20] sm:$0xf]
  %v29 = vld [vmem:[%s1] sm:$0xff]
  %v30 = vld [vmem:[%s1 + $0x8] sm:$0xff]
  %v31 = vld [vmem:[%s1 + $0x10] sm:$0xff]
  %v32 = vld [vmem:[%s1 + $0x18] sm:$0xff]
  %v33 = vld [vmem:[%s1 + $0x20] sm:$0xf]
  %v34 = vld [vmem:[%s3] sm:$0xff]
  %v35 = vld [vmem:[%s3 + $0x8] sm:$0xff]
  %v36 = vld [vmem:[%s3 + $0x10] sm:$0xff]
  %v37 = vld [vmem:[%s3 + $0x18] sm:$0xff]
  %v38 = vld [vmem:[%s3 + $0x20] sm:$0xff]
  %v39 = vld [vmem:[%s3 + $0x28] sm:$0xff]
  %v40 = vld [vmem:[%s3 + $0x30] sm:$0xff]
  %v41 = vld [vmem:[%s3 + $0x38] sm:$0xff]
  %v42 = vld [vmem:[%s3 + $0x40] sm:$0xff]
  %v43 = vld [vmem:[%s3 + $0x48] sm:$0xff]
  %v44 = vld [vmem:[%s3 + $0x50] sm:$0xff]
  %v45 = vld [vmem:[%s3 + $0x58] sm:$0xff]
  %v46 = vld [vmem:[%s3 + $0x60] sm:$0xff]
  %v47 = vld [vmem:[%s3 + $0x68] sm:$0xff]
  %v48 = vld [vmem:[%s3 + $0x70] sm:$0xff]
  %v49 = vld [vmem:[%s3 + $0x78] sm:$0xff]
  %50 = vst [vmem:[#allocation2 + $0x7] sm:$0x1] 0.0
  %51 = vst [vmem:[#allocation2 + $0x2c] sm:$0x1] 0.0
  %v52 = vld [vmem:[%s2] sm:$0x1]
  %v53 = vld [vmem:[%s2 + $0x1] sm:$0x1]
  %54 = vmatprep.subr.mxu0 0.0
  %55 = vmatpush1.msra.mxu0 %v34
  %56 = vmatprep.subr.mxu0 0.0
  %57 = vmatpush1.msra.mxu0 %v35
  %58 = vmatprep.subr.mxu0 0.0
  %59 = vmatpush1.msra.mxu0 %v36
  %60 = vmatprep.subr.mxu0 0.0
  %61 = vmatpush1.msra.mxu0 %v37
  %62 = vmatprep.subr.mxu0 0.0
  %63 = vmatpush1.msra.mxu0 %v38
  %64 = vmatprep.subr.mxu0 0.0
  %65 = vmatpush1.msra.mxu0 %v39
  %66 = vmatprep.subr.mxu0 0.0
  %67 = vmatpush1.msra.mxu0 %v40
  %68 = vmatprep.subr.mxu0 0.0
  %69 = vmatpush1.msra.mxu0 %v41
  %70 = vmatprep.subr.mxu0 0.0
  %71 = vmatpush1.msra.mxu0 %v42
  %72 = vmatprep.subr.mxu0 0.0
  %73 = vmatpush1.msra.mxu0 %v43
  %74 = vmatprep.subr.mxu0 0.0
  %75 = vmatpush1.msra.mxu0 %v44
  %76 = vmatprep.subr.mxu0 0.0
  %77 = vmatpush1.msra.mxu0 %v45
  %78 = vmatprep.subr.mxu0 0.0
  %79 = vmatpush1.msra.mxu0 %v46
  %80 = vmatprep.subr.mxu0 0.0
  %81 = vmatpush1.msra.mxu0 %v47
  %82 = vmatprep.subr.mxu0 0.0
  %83 = vmatpush1.msra.mxu0 %v48
  %84 = vmatprep.subr.mxu0 0.0
  %85 = vmatpush1.msra.mxu0 %v49
  %86 = vmatprep.subr.mxu0 0.0
  %87 = vmatpush1.msra.mxu0 0.0
  %88 = vmatprep.subr.mxu0 0.0
  %89 = vmatpush1.msra.mxu0 0.0
  %90 = vmatprep.subr.mxu0 0.0
  %91 = vmatpush1.msra.mxu0 0.0
  %92 = vmatprep.subr.mxu0 0.0
  %93 = vmatpush1.msra.mxu0 0.0
  %94 = vmatprep.subr.mxu0 0.0
  %95 = vmatpush1.msra.mxu0 0.0
  %96 = vmatprep.subr.mxu0 0.0
  %97 = vmatpush1.msra.mxu0 0.0
  %98 = vmatprep.subr.mxu0 0.0
  %99 = vmatpush1.msra.mxu0 0.0
  %100 = vmatprep.subr.mxu0 0.0
  %101 = vmatpush1.msra.mxu0 0.0
  %102 = vmatprep.subr.mxu0 0.0
  %103 = vmatpush1.msra.mxu0 0.0
  %104 = vmatprep.subr.mxu0 0.0
  %105 = vmatpush1.msra.mxu0 0.0
  %106 = vmatprep.subr.mxu0 0.0
  %107 = vmatpush1.msra.mxu0 0.0
  %108 = vmatprep.subr.mxu0 0.0
  %109 = vmatpush1.msra.mxu0 0.0
  %110 = vmatprep.subr.mxu0 0.0
  %111 = vmatpush1.msra.mxu0 0.0
  %112 = vmatprep.subr.mxu0 0.0
  %113 = vmatpush1.msra.mxu0 0.0
  %114 = vmatprep.subr.mxu0 0.0
  %115 = vmatpush1.msra.mxu0 0.0
  %116 = vmatprep.subr.mxu0 0.0
  %117 = vmatpush1.msra.mxu0 0.0
  %118 = vmatprep.mubr.f32.mxu0 0.0
  %119 = vmatmul.mubr.f32.gmra.mrb[0].mxu0 %v24
  %v120 = vpop.f32.mrb[0].mxu0
  %v121 = vadd.f32 0.0, %v120
  %v122 = vpop.f32.mrb[0].mxu0
  %123 = vmatprep.mubr.f32.mxu0 0.0
  %124 = vmatmul.mubr.f32.gmra.mrb[0].mxu0 %v25
  %v125 = vpop.f32.mrb[0].mxu0
  %v126 = vadd.f32 0.0, %v125
  %v127 = vpop.f32.mrb[0].mxu0
  %128 = vmatprep.mubr.f32.mxu0 0.0
  %129 = vmatmul.mubr.f32.gmra.mrb[0].mxu0 %v26
  %v130 = vpop.f32.mrb[0].mxu0
  %v131 = vadd.f32 0.0, %v130
  %v132 = vpop.f32.mrb[0].mxu0
  %133 = vmatprep.mubr.f32.mxu0 0.0
  %134 = vmatmul.mubr.f32.gmra.mrb[0].mxu0 %v27
  %v135 = vpop.f32.mrb[0].mxu0
  %v136 = vadd.f32 0.0, %v135
  %v137 = vpop.f32.mrb[0].mxu0
  %138 = vmatprep.mubr.f32.mxu0 0.0
  %139 = vmatmul.mubr.f32.gmra.mrb[0].mxu0 %v28
  %v140 = vpop.f32.mrb[0].mxu0
  %v141 = vadd.f32 0.0, %v140
  %v142 = vpop.f32.mrb[0].mxu0
  %143 = vdwg.mxu0
  %v144 = vadd.f32 %v121, %v126
  %v145 = vadd.f32 %v144, %v131
  %v146 = vadd.f32 %v145, %v136
  %vm147 = vcmask 1043456
  %v148 = vsel %vm147, %v141, 0.0
  %v149 = vadd.f32 %v146, %v148
  %v150 = vrot.slane %v149, 4
  %v151 = vadd.f32 %v149, %v150
  %v152 = vrot.slane %v151, 2
  %v153 = vadd.f32 %v151, %v152
  %v154 = vrot.slane %v153, 1
  %v155 = vadd.f32 %v153, %v154
  %v156 = vmul.f32 %v24, %v24
  %v157 = vmul.f32 %v25, %v25
  %v158 = vmul.f32 %v26, %v26
  %v159 = vmul.f32 %v27, %v27
  %v160 = vmul.f32 %v28, %v28
  %161 = vmatprep.subr.mxu0 0.0
  %162 = vmatpush1.msra.mxu0 %v34
  %163 = vmatprep.subr.mxu0 0.0
  %164 = vmatpush1.msra.mxu0 %v35
  %165 = vmatprep.subr.mxu0 0.0
  %166 = vmatpush1.msra.mxu0 %v36
  %167 = vmatprep.subr.mxu0 0.0
  %168 = vmatpush1.msra.mxu0 %v37
  %169 = vmatprep.subr.mxu0 0.0
  %170 = vmatpush1.msra.mxu0 %v38
  %171 = vmatprep.subr.mxu0 0.0
  %172 = vmatpush1.msra.mxu0 %v39
  %173 = vmatprep.subr.mxu0 0.0
  %174 = vmatpush1.msra.mxu0 %v40
  %175 = vmatprep.subr.mxu0 0.0
  %176 = vmatpush1.msra.mxu0 %v41
  %177 = vmatprep.subr.mxu0 0.0
  %178 = vmatpush1.msra.mxu0 %v42
  %179 = vmatprep.subr.mxu0 0.0
  %180 = vmatpush1.msra.mxu0 %v43
  %181 = vmatprep.subr.mxu0 0.0
  %182 = vmatpush1.msra.mxu0 %v44
  %183 = vmatprep.subr.mxu0 0.0
  %184 = vmatpush1.msra.mxu0 %v45
  %185 = vmatprep.subr.mxu0 0.0
  %186 = vmatpush1.msra.mxu0 %v46
  %187 = vmatprep.subr.mxu0 0.0
  %188 = vmatpush1.msra.mxu0 %v47
  %189 = vmatprep.subr.mxu0 0.0
  %190 = vmatpush1.msra.mxu0 %v48
  %191 = vmatprep.subr.mxu0 0.0
  %192 = vmatpush1.msra.mxu0 %v49
  %193 = vmatprep.subr.mxu0 0.0
  %194 = vmatpush1.msra.mxu0 0.0
  %195 = vmatprep.subr.mxu0 0.0
  %196 = vmatpush1.msra.mxu0 0.0
  %197 = vmatprep.subr.mxu0 0.0
  %198 = vmatpush1.msra.mxu0 0.0
  %199 = vmatprep.subr.mxu0 0.0
  %200 = vmatpush1.msra.mxu0 0.0
  %201 = vmatprep.subr.mxu0 0.0
  %202 = vmatpush1.msra.mxu0 0.0
  %203 = vmatprep.subr.mxu0 0.0
  %204 = vmatpush1.msra.mxu0 0.0
  %205 = vmatprep.subr.mxu0 0.0
  %206 = vmatpush1.msra.mxu0 0.0
  %207 = vmatprep.subr.mxu0 0.0
  %208 = vmatpush1.msra.mxu0 0.0
  %209 = vmatprep.subr.mxu0 0.0
  %210 = vmatpush1.msra.mxu0 0.0
  %211 = vmatprep.subr.mxu0 0.0
  %212 = vmatpush1.msra.mxu0 0.0
  %213 = vmatprep.subr.mxu0 0.0
  %214 = vmatpush1.msra.mxu0 0.0
  %215 = vmatprep.subr.mxu0 0.0
  %216 = vmatpush1.msra.mxu0 0.0
  %217 = vmatprep.subr.mxu0 0.0
  %218 = vmatpush1.msra.mxu0 0.0
  %219 = vmatprep.subr.mxu0 0.0
  %220 = vmatpush1.msra.mxu0 0.0
  %221 = vmatprep.subr.mxu0 0.0
  %222 = vmatpush1.msra.mxu0 0.0
  %223 = vmatprep.subr.mxu0 0.0
  %224 = vmatpush1.msra.mxu0 0.0
  %225 = vmatprep.mubr.f32.mxu0 0.0
  %226 = vmatmul.mubr.f32.gmra.mrb[0].mxu0 %v156
  %v227 = vpop.f32.mrb[0].mxu0
  %v228 = vadd.f32 0.0, %v227
  %v229 = vpop.f32.mrb[0].mxu0
  %230 = vmatprep.mubr.f32.mxu0 0.0
  %231 = vmatmul.mubr.f32.gmra.mrb[0].mxu0 %v157
  %v232 = vpop.f32.mrb[0].mxu0
  %v233 = vadd.f32 0.0, %v232
  %v234 = vpop.f32.mrb[0].mxu0
  %235 = vmatprep.mubr.f32.mxu0 0.0
  %236 = vmatmul.mubr.f32.gmra.mrb[0].mxu0 %v158
  %v237 = vpop.f32.mrb[0].mxu0
  %v238 = vadd.f32 0.0, %v237
  %v239 = vpop.f32.mrb[0].mxu0
  %240 = vmatprep.mubr.f32.mxu0 0.0
  %241 = vmatmul.mubr.f32.gmra.mrb[0].mxu0 %v159
  %v242 = vpop.f32.mrb[0].mxu0
  %v243 = vadd.f32 0.0, %v242
  %v244 = vpop.f32.mrb[0].mxu0
  %245 = vmatprep.mubr.f32.mxu0 0.0
  %246 = vmatmul.mubr.f32.gmra.mrb[0].mxu0 %v160
  %v247 = vpop.f32.mrb[0].mxu0
  %v248 = vadd.f32 0.0, %v247
  %v249 = vpop.f32.mrb[0].mxu0
  %250 = vdwg.mxu0
  %v251 = vadd.f32 %v228, %v233
  %v252 = vadd.f32 %v251, %v238
  %v253 = vadd.f32 %v252, %v243
  %v254 = vsel %vm147, %v248, 0.0
  %v255 = vadd.f32 %v253, %v254
  %v256 = vrot.slane %v255, 4
  %v257 = vadd.f32 %v255, %v256
  %v258 = vrot.slane %v257, 2
  %v259 = vadd.f32 %v257, %v258
  %v260 = vrot.slane %v259, 1
  %v261 = vadd.f32 %v259, %v260
  %v262 = vmul.f32 %v155, 0.001953125
  %v263 = vmul.f32 %v261, 0.001953125
  %v264 = vmul.f32 %v262, %v262
  %v265 = vsub.f32 %v263, %v264
  %v266 = vadd.f32 %v265, 1e-05
  %v267 = vrsqrt.pop %v266
  %v268 = vmul.f32 %v52, %v267
  %v269 = vmul.f32 %v262, %v268
  %v270 = vsub.f32 %v53, %v269
  %v271 = vlaneseq
  %v272 = vshrl.u32 %v271, 7
  %v273 = vsub.s32 0, %v272
  %v274 = vrot.slane %v268, %v273
  %v275 = vmul.f32 %v24, %v274
  %v276 = vmul.f32 %v25, %v274
  %v277 = vmul.f32 %v26, %v274
  %v278 = vmul.f32 %v27, %v274
  %v279 = vmul.f32 %v28, %v274
  %v280 = vlaneseq
  %v281 = vshrl.u32 %v280, 7
  %v282 = vsub.s32 0, %v281
  %v283 = vrot.slane %v270, %v282
  %v284 = vadd.f32 %v275, %v283
  %v285 = vadd.f32 %v276, %v283
  %v286 = vadd.f32 %v277, %v283
  %v287 = vadd.f32 %v278, %v283
  %v288 = vadd.f32 %v279, %v283
  %v289 = vmax.f32 %v284, 0.0
  %v290 = vmax.f32 %v285, 0.0
  %v291 = vmax.f32 %v286, 0.0
  %v292 = vmax.f32 %v287, 0.0
  %v293 = vmax.f32 %v288, 0.0
  %295 = vset.pattern.permute.xlu0 0
  %296 = vperm.xlu0 %295, %v29
  %v297 = vpop.permute.xlu0 %296
  %300 = vset.pattern.permute.xlu0 0
  %301 = vperm.xlu0 %300, %v30
  %v302 = vpop.permute.xlu0 %301
  %305 = vset.pattern.permute.xlu0 0
  %306 = vperm.xlu0 %305, %v31
  %v307 = vpop.permute.xlu0 %306
  %310 = vset.pattern.permute.xlu0 0
  %311 = vperm.xlu0 %310, %v32
  %v312 = vpop.permute.xlu0 %311
  %315 = vset.pattern.permute.xlu0 0
  %316 = vperm.xlu0 %315, %v33
  %v317 = vpop.permute.xlu0 %316
  %v319 = vmul.f32 %v289, %v297
  %v320 = vmul.f32 %v290, %v302
  %v321 = vmul.f32 %v291, %v307
  %v322 = vmul.f32 %v292, %v312
  %v323 = vmul.f32 %v293, %v317
  %324 = vst [vmem:[#allocation2 + $0x8] sm:$0xff] %v319
  %325 = vst [vmem:[#allocation2 + $0x10] sm:$0xff] %v320
  %326 = vst [vmem:[#allocation2 + $0x18] sm:$0xff] %v321
  %327 = vst [vmem:[#allocation2 + $0x20] sm:$0xff] %v322
  %328 = vst [vmem:[#allocation2 + $0x28] sm:$0xf] %v323
  %v329 = vld [vmem:[#allocation2 + $0x7] sm:$0xff]
  %v330 = vld [vmem:[#allocation2 + $0xf] sm:$0xff]
  %v331 = vld [vmem:[#allocation2 + $0x17] sm:$0xff]
  %v332 = vld [vmem:[#allocation2 + $0x1f] sm:$0xff]
  %v333 = vld [vmem:[#allocation2 + $0x27] sm:$0xf]
  %v334 = vld [vmem:[#allocation2 + $0x9] sm:$0xff]
  %v335 = vld [vmem:[#allocation2 + $0x11] sm:$0xff]
  %v336 = vld [vmem:[#allocation2 + $0x19] sm:$0xff]
  %v337 = vld [vmem:[#allocation2 + $0x21] sm:$0xff]
  %v338 = vld [vmem:[#allocation2 + $0x29] sm:$0xf]
  %v339 = vpack.c.bf16 %v330, %v329
  %v340 = vpack.c.bf16 %v320, %v319
  %v341 = vpack.c.bf16 %v335, %v334
  %v342 = vpack.c.bf16 %v332, %v331
  %v343 = vpack.c.bf16 %v322, %v321
  %v344 = vpack.c.bf16 %v337, %v336
  %v345 = vpack.c.bf16 %v333, %v333
  %v346 = vpack.c.bf16 %v323, %v323
  %v347 = vpack.c.bf16 %v338, %v338
  %v348 = vld [vmem:[%s4] sm:$0xf]
  %v349 = vld [vmem:[%s4 + $0x4] sm:$0xf]
  %v350 = vld [vmem:[%s4 + $0x8] sm:$0xf]
  %v351 = vld [vmem:[%s4 + $0xc] sm:$0xf]
  %v352 = vld [vmem:[%s4 + $0x10] sm:$0xf]
  %v353 = vld [vmem:[%s4 + $0x14] sm:$0xf]
  %v354 = vld [vmem:[%s4 + $0x18] sm:$0xf]
  %v355 = vld [vmem:[%s4 + $0x1c] sm:$0xf]
  %v356 = vld [vmem:[%s4 + $0x20] sm:$0xf]
  %v357 = vld [vmem:[%s4 + $0x24] sm:$0xf]
  %v358 = vld [vmem:[%s4 + $0x28] sm:$0xf]
  %v359 = vld [vmem:[%s4 + $0x2c] sm:$0xf]
  %v360 = vld [vmem:[%s4 + $0x30] sm:$0xf]
  %v361 = vld [vmem:[%s4 + $0x34] sm:$0xf]
  %v362 = vld [vmem:[%s4 + $0x38] sm:$0xf]
  %v363 = vld [vmem:[%s4 + $0x3c] sm:$0xf]
  %v364 = vld [vmem:[%s4 + $0x40] sm:$0xf]
  %v365 = vld [vmem:[%s4 + $0x44] sm:$0xf]
  %v366 = vld [vmem:[%s4 + $0x48] sm:$0xf]
  %v367 = vld [vmem:[%s4 + $0x4c] sm:$0xf]
  %v368 = vld [vmem:[%s4 + $0x50] sm:$0xf]
  %v369 = vld [vmem:[%s4 + $0x54] sm:$0xf]
  %v370 = vld [vmem:[%s4 + $0x58] sm:$0xf]
  %v371 = vld [vmem:[%s4 + $0x5c] sm:$0xf]
  %v372 = vld [vmem:[%s4 + $0x60] sm:$0xf]
  %v373 = vld [vmem:[%s4 + $0x64] sm:$0xf]
  %v374 = vld [vmem:[%s4 + $0x68] sm:$0xf]
  %v375 = vld [vmem:[%s4 + $0x6c] sm:$0xf]
  %v376 = vld [vmem:[%s4 + $0x70] sm:$0xf]
  %v377 = vld [vmem:[%s4 + $0x74] sm:$0xf]
  %v378 = vld [vmem:[%s4 + $0x78] sm:$0xf]
  %v379 = vld [vmem:[%s4 + $0x7c] sm:$0xf]
  %v380 = vld [vmem:[%s4 + $0x80] sm:$0xf]
  %v381 = vld [vmem:[%s4 + $0x84] sm:$0xf]
  %v382 = vld [vmem:[%s4 + $0x88] sm:$0xf]
  %v383 = vld [vmem:[%s4 + $0x8c] sm:$0xf]
  %v384 = vld [vmem:[%s4 + $0x90] sm:$0xf]
  %v385 = vld [vmem:[%s4 + $0x94] sm:$0xf]
  %v386 = vld [vmem:[%s4 + $0x98] sm:$0xf]
  %v387 = vld [vmem:[%s4 + $0x9c] sm:$0xf]
  %v388 = vld [vmem:[%s4 + $0xa0] sm:$0xf]
  %v389 = vld [vmem:[%s4 + $0xa4] sm:$0xf]
  %v390 = vld [vmem:[%s4 + $0xa8] sm:$0xf]
  %v391 = vld [vmem:[%s4 + $0xac] sm:$0xf]
  %v392 = vld [vmem:[%s4 + $0xb0] sm:$0xf]
  %v393 = vld [vmem:[%s4 + $0xb4] sm:$0xf]
  %v394 = vld [vmem:[%s4 + $0xb8] sm:$0xf]
  %v395 = vld [vmem:[%s4 + $0xbc] sm:$0xf]
  %v444 = vunpack.c.l.b16 %v348
  %v445 = vunpack.c.l.b16 %v349
  %v446 = vunpack.c.l.b16 %v350
  %v447 = vunpack.c.l.b16 %v351
  %v448 = vunpack.c.l.b16 %v352
  %v449 = vunpack.c.l.b16 %v353
  %v450 = vunpack.c.l.b16 %v354
  %v451 = vunpack.c.l.b16 %v355
  %v452 = vunpack.c.l.b16 %v356
  %v453 = vunpack.c.l.b16 %v357
  %v454 = vunpack.c.l.b16 %v358
  %v455 = vunpack.c.l.b16 %v359
  %v456 = vunpack.c.l.b16 %v360
  %v457 = vunpack.c.l.b16 %v361
  %v458 = vunpack.c.l.b16 %v362
  %v459 = vunpack.c.l.b16 %v363
  %v460 = vunpack.c.l.b16 %v364
  %v461 = vunpack.c.l.b16 %v365
  %v462 = vunpack.c.l.b16 %v366
  %v463 = vunpack.c.l.b16 %v367
  %v464 = vunpack.c.l.b16 %v368
  %v465 = vunpack.c.l.b16 %v369
  %v466 = vunpack.c.l.b16 %v370
  %v467 = vunpack.c.l.b16 %v371
  %v468 = vunpack.c.l.b16 %v372
  %v469 = vunpack.c.l.b16 %v373
  %v470 = vunpack.c.l.b16 %v374
  %v471 = vunpack.c.l.b16 %v375
  %v472 = vunpack.c.l.b16 %v376
  %v473 = vunpack.c.l.b16 %v377
  %v474 = vunpack.c.l.b16 %v378
  %v475 = vunpack.c.l.b16 %v379
  %v476 = vunpack.c.l.b16 %v380
  %v477 = vunpack.c.l.b16 %v381
  %v478 = vunpack.c.l.b16 %v382
  %v479 = vunpack.c.l.b16 %v383
  %v480 = vunpack.c.l.b16 %v384
  %v481 = vunpack.c.l.b16 %v385
  %v482 = vunpack.c.l.b16 %v386
  %v483 = vunpack.c.l.b16 %v387
  %v484 = vunpack.c.l.b16 %v388
  %v485 = vunpack.c.l.b16 %v389
  %v486 = vunpack.c.l.b16 %v390
  %v487 = vunpack.c.l.b16 %v391
  %v488 = vunpack.c.l.b16 %v392
  %v489 = vunpack.c.l.b16 %v393
  %v490 = vunpack.c.l.b16 %v394
  %v491 = vunpack.c.l.b16 %v395
  %v492 = vpack.c.b16 %v445, %v444
  %v493 = vpack.c.b16 %v447, %v446
  %v494 = vpack.c.b16 %v449, %v448
  %v495 = vpack.c.b16 %v451, %v450
  %v496 = vpack.c.b16 %v453, %v452
  %v497 = vpack.c.b16 %v455, %v454
  %v498 = vpack.c.b16 %v457, %v456
  %v499 = vpack.c.b16 %v459, %v458
  %v500 = vpack.c.b16 %v461, %v460
  %v501 = vpack.c.b16 %v463, %v462
  %v502 = vpack.c.b16 %v465, %v464
  %v503 = vpack.c.b16 %v467, %v466
  %v504 = vpack.c.b16 %v469, %v468
  %v505 = vpack.c.b16 %v471, %v470
  %v506 = vpack.c.b16 %v473, %v472
  %v507 = vpack.c.b16 %v475, %v474
  %v508 = vpack.c.b16 %v477, %v476
  %v509 = vpack.c.b16 %v479, %v478
  %v510 = vpack.c.b16 %v481, %v480
  %v511 = vpack.c.b16 %v483, %v482
  %v512 = vpack.c.b16 %v485, %v484
  %v513 = vpack.c.b16 %v487, %v486
  %v514 = vpack.c.b16 %v489, %v488
  %v515 = vpack.c.b16 %v491, %v490
  %540 = vmatprep.subr.bf16.mxu0 0
  %541 = vmatpush1.bf16.msra.mxu0 %v492
  %542 = vmatprep.subr.bf16.mxu0 0
  %543 = vmatpush1.bf16.msra.mxu0 %v493
  %544 = vmatprep.subr.bf16.mxu0 0
  %545 = vmatpush1.bf16.msra.mxu0 %v494
  %546 = vmatprep.subr.bf16.mxu0 0
  %547 = vmatpush1.bf16.msra.mxu0 %v495
  %548 = vmatprep.subr.bf16.mxu0 0
  %549 = vmatpush1.bf16.msra.mxu0 %v496
  %550 = vmatprep.subr.bf16.mxu0 0
  %551 = vmatpush1.bf16.msra.mxu0 %v497
  %552 = vmatprep.subr.bf16.mxu0 0
  %553 = vmatpush1.bf16.msra.mxu0 %v498
  %554 = vmatprep.subr.bf16.mxu0 0
  %555 = vmatpush1.bf16.msra.mxu0 %v499
  %556 = vmatprep.subr.bf16.mxu0 0
  %557 = vmatpush1.bf16.msra.mxu0 %v500
  %558 = vmatprep.subr.bf16.mxu0 0
  %559 = vmatpush1.bf16.msra.mxu0 %v501
  %560 = vmatprep.subr.bf16.mxu0 0
  %561 = vmatpush1.bf16.msra.mxu0 %v502
  %562 = vmatprep.subr.bf16.mxu0 0
  %563 = vmatpush1.bf16.msra.mxu0 %v503
  %564 = vmatprep.subr.bf16.mxu0 0
  %565 = vmatpush1.bf16.msra.mxu0 %v504
  %566 = vmatprep.subr.bf16.mxu0 0
  %567 = vmatpush1.bf16.msra.mxu0 %v505
  %568 = vmatprep.subr.bf16.mxu0 0
  %569 = vmatpush1.bf16.msra.mxu0 %v506
  %570 = vmatprep.subr.bf16.mxu0 0
  %571 = vmatpush1.bf16.msra.mxu0 %v507
  %572 = vmatprep.mubr.bf16.mxu0 %v340
  %573 = vmatmul.mubr.bf16.gmra.mrb[0].mxu0 %v339
  %v574 = vpop.f32.mrb[0].mxu0
  %v575 = vadd.f32 0.0, %v574
  %v576 = vpop.f32.mrb[0].mxu0
  %v577 = vpop.f32.mrb[0].mxu0
  %v578 = vadd.f32 0.0, %v577
  %v579 = vpop.f32.mrb[0].mxu0
  %580 = vmatprep.mubr.bf16.mxu0 %v343
  %581 = vmatmul.mubr.bf16.gmra.mrb[0].mxu0 %v342
  %v582 = vpop.f32.mrb[0].mxu0
  %v583 = vadd.f32 0.0, %v582
  %v584 = vpop.f32.mrb[0].mxu0
  %v585 = vpop.f32.mrb[0].mxu0
  %v586 = vadd.f32 0.0, %v585
  %v587 = vpop.f32.mrb[0].mxu0
  %588 = vmatprep.mubr.bf16.mxu0 %v346
  %589 = vmatmul.mubr.bf16.gmra.mrb[0].mxu0 %v345
  %v590 = vpop.f32.mrb[0].mxu0
  %v591 = vadd.f32 0.0, %v590
  %v592 = vpop.f32.mrb[0].mxu0
  %v593 = vpop.f32.mrb[0].mxu0
  %v594 = vpop.f32.mrb[0].mxu0
  %595 = vdwg.mxu0
  %596 = vmatprep.subr.bf16.mxu0 0
  %597 = vmatpush1.bf16.msra.mxu0 %v508
  %598 = vmatprep.subr.bf16.mxu0 0
  %599 = vmatpush1.bf16.msra.mxu0 %v509
  %600 = vmatprep.subr.bf16.mxu0 0
  %601 = vmatpush1.bf16.msra.mxu0 %v510
  %602 = vmatprep.subr.bf16.mxu0 0
  %603 = vmatpush1.bf16.msra.mxu0 %v511
  %604 = vmatprep.subr.bf16.mxu0 0
  %605 = vmatpush1.bf16.msra.mxu0 %v512
  %606 = vmatprep.subr.bf16.mxu0 0
  %607 = vmatpush1.bf16.msra.mxu0 %v513
  %608 = vmatprep.subr.bf16.mxu0 0
  %609 = vmatpush1.bf16.msra.mxu0 %v514
  %610 = vmatprep.subr.bf16.mxu0 0
  %611 = vmatpush1.bf16.msra.mxu0 %v515
  %612 = vmatprep.subr.bf16.mxu0 0
  %613 = vmatpush1.bf16.msra.mxu0 0
  %614 = vmatprep.subr.bf16.mxu0 0
  %615 = vmatpush1.bf16.msra.mxu0 0
  %616 = vmatprep.subr.bf16.mxu0 0
  %617 = vmatpush1.bf16.msra.mxu0 0
  %618 = vmatprep.subr.bf16.mxu0 0
  %619 = vmatpush1.bf16.msra.mxu0 0
  %620 = vmatprep.subr.bf16.mxu0 0
  %621 = vmatpush1.bf16.msra.mxu0 0
  %622 = vmatprep.subr.bf16.mxu0 0
  %623 = vmatpush1.bf16.msra.mxu0 0
  %624 = vmatprep.subr.bf16.mxu0 0
  %625 = vmatpush1.bf16.msra.mxu0 0
  %626 = vmatprep.subr.bf16.mxu0 0
  %627 = vmatpush1.bf16.msra.mxu0 0
  %628 = vmatprep.mubr.bf16.mxu0 0
  %629 = vmatmul.mubr.bf16.gmra.mrb[0].mxu0 %v341
  %v630 = vpop.f32.mrb[0].mxu0
  %v631 = vadd.f32 %v575, %v630
  %v632 = vpop.f32.mrb[0].mxu0
  %v633 = vpop.f32.mrb[0].mxu0
  %v634 = vadd.f32 %v578, %v633
  %v635 = vpop.f32.mrb[0].mxu0
  %636 = vmatprep.mubr.bf16.mxu0 0
  %637 = vmatmul.mubr.bf16.gmra.mrb[0].mxu0 %v344
  %v638 = vpop.f32.mrb[0].mxu0
  %v639 = vadd.f32 %v583, %v638
  %v640 = vpop.f32.mrb[0].mxu0
  %v641 = vpop.f32.mrb[0].mxu0
  %v642 = vadd.f32 %v586, %v641
  %v643 = vpop.f32.mrb[0].mxu0
  %644 = vmatprep.mubr.bf16.mxu0 0
  %645 = vmatmul.mubr.bf16.gmra.mrb[0].mxu0 %v347
  %v646 = vpop.f32.mrb[0].mxu0
  %v647 = vadd.f32 %v591, %v646
  %v648 = vpop.f32.mrb[0].mxu0
  %v649 = vpop.f32.mrb[0].mxu0
  %v650 = vpop.f32.mrb[0].mxu0
  %651 = vdwg.mxu0
  %v652 = vmul.f32 %v631, %v297
  %v653 = vmul.f32 %v634, %v302
  %v654 = vmul.f32 %v639, %v307
  %v655 = vmul.f32 %v642, %v312
  %v656 = vmul.f32 %v647, %v317
  %v657 = vld [vmem:[%s2 + $0x2] sm:$0x1]
  %v658 = vld [vmem:[%s2 + $0x3] sm:$0x1]
  %659 = vmatprep.subr.mxu0 0.0
  %660 = vmatpush1.msra.mxu0 %v34
  %661 = vmatprep.subr.mxu0 0.0
  %662 = vmatpush1.msra.mxu0 %v35
  %663 = vmatprep.subr.mxu0 0.0
  %664 = vmatpush1.msra.mxu0 %v36
  %665 = vmatprep.subr.mxu0 0.0
  %666 = vmatpush1.msra.mxu0 %v37
  %667 = vmatprep.subr.mxu0 0.0
  %668 = vmatpush1.msra.mxu0 %v38
  %669 = vmatprep.subr.mxu0 0.0
  %670 = vmatpush1.msra.mxu0 %v39
  %671 = vmatprep.subr.mxu0 0.0
  %672 = vmatpush1.msra.mxu0 %v40
  %673 = vmatprep.subr.mxu0 0.0
  %674 = vmatpush1.msra.mxu0 %v41
  %675 = vmatprep.subr.mxu0 0.0
  %676 = vmatpush1.msra.mxu0 %v42
  %677 = vmatprep.subr.mxu0 0.0
  %678 = vmatpush1.msra.mxu0 %v43
  %679 = vmatprep.subr.mxu0 0.0
  %680 = vmatpush1.msra.mxu0 %v44
  %681 = vmatprep.subr.mxu0 0.0
  %682 = vmatpush1.msra.mxu0 %v45
  %683 = vmatprep.subr.mxu0 0.0
  %684 = vmatpush1.msra.mxu0 %v46
  %685 = vmatprep.subr.mxu0 0.0
  %686 = vmatpush1.msra.mxu0 %v47
  %687 = vmatprep.subr.mxu0 0.0
  %688 = vmatpush1.msra.mxu0 %v48
  %689 = vmatprep.subr.mxu0 0.0
  %690 = vmatpush1.msra.mxu0 %v49
  %691 = vmatprep.subr.mxu0 0.0
  %692 = vmatpush1.msra.mxu0 0.0
  %693 = vmatprep.subr.mxu0 0.0
  %694 = vmatpush1.msra.mxu0 0.0
  %695 = vmatprep.subr.mxu0 0.0
  %696 = vmatpush1.msra.mxu0 0.0
  %697 = vmatprep.subr.mxu0 0.0
  %698 = vmatpush1.msra.mxu0 0.0
  %699 = vmatprep.subr.mxu0 0.0
  %700 = vmatpush1.msra.mxu0 0.0
  %701 = vmatprep.subr.mxu0 0.0
  %702 = vmatpush1.msra.mxu0 0.0
  %703 = vmatprep.subr.mxu0 0.0
  %704 = vmatpush1.msra.mxu0 0.0
  %705 = vmatprep.subr.mxu0 0.0
  %706 = vmatpush1.msra.mxu0 0.0
  %707 = vmatprep.subr.mxu0 0.0
  %708 = vmatpush1.msra.mxu0 0.0
  %709 = vmatprep.subr.mxu0 0.0
  %710 = vmatpush1.msra.mxu0 0.0
  %711 = vmatprep.subr.mxu0 0.0
  %712 = vmatpush1.msra.mxu0 0.0
  %713 = vmatprep.subr.mxu0 0.0
  %714 = vmatpush1.msra.mxu0 0.0
  %715 = vmatprep.subr.mxu0 0.0
  %716 = vmatpush1.msra.mxu0 0.0
  %717 = vmatprep.subr.mxu0 0.0
  %718 = vmatpush1.msra.mxu0 0.0
  %719 = vmatprep.subr.mxu0 0.0
  %720 = vmatpush1.msra.mxu0 0.0
  %721 = vmatprep.subr.mxu0 0.0
  %722 = vmatpush1.msra.mxu0 0.0
  %723 = vmatprep.mubr.f32.mxu0 0.0
  %724 = vmatmul.mubr.f32.gmra.mrb[0].mxu0 %v652
  %v725 = vpop.f32.mrb[0].mxu0
  %v726 = vadd.f32 0.0, %v725
  %v727 = vpop.f32.mrb[0].mxu0
  %728 = vmatprep.mubr.f32.mxu0 0.0
  %729 = vmatmul.mubr.f32.gmra.mrb[0].mxu0 %v653
  %v730 = vpop.f32.mrb[0].mxu0
  %v731 = vadd.f32 0.0, %v730
  %v732 = vpop.f32.mrb[0].mxu0
  %733 = vmatprep.mubr.f32.mxu0 0.0
  %734 = vmatmul.mubr.f32.gmra.mrb[0].mxu0 %v654
  %v735 = vpop.f32.mrb[0].mxu0
  %v736 = vadd.f32 0.0, %v735
  %v737 = vpop.f32.mrb[0].mxu0
  %738 = vmatprep.mubr.f32.mxu0 0.0
  %739 = vmatmul.mubr.f32.gmra.mrb[0].mxu0 %v655
  %v740 = vpop.f32.mrb[0].mxu0
  %v741 = vadd.f32 0.0, %v740
  %v742 = vpop.f32.mrb[0].mxu0
  %743 = vmatprep.mubr.f32.mxu0 0.0
  %744 = vmatmul.mubr.f32.gmra.mrb[0].mxu0 %v656
  %v745 = vpop.f32.mrb[0].mxu0
  %v746 = vadd.f32 0.0, %v745
  %v747 = vpop.f32.mrb[0].mxu0
  %748 = vdwg.mxu0
  %v749 = vadd.f32 %v726, %v731
  %v750 = vadd.f32 %v749, %v736
  %v751 = vadd.f32 %v750, %v741
  %v752 = vsel %vm147, %v746, 0.0
  %v753 = vadd.f32 %v751, %v752
  %v754 = vrot.slane %v753, 4
  %v755 = vadd.f32 %v753, %v754
  %v756 = vrot.slane %v755, 2
  %v757 = vadd.f32 %v755, %v756
  %v758 = vrot.slane %v757, 1
  %v759 = vadd.f32 %v757, %v758
  %v760 = vmul.f32 %v652, %v652
  %v761 = vmul.f32 %v653, %v653
  %v762 = vmul.f32 %v654, %v654
  %v763 = vmul.f32 %v655, %v655
  %v764 = vmul.f32 %v656, %v656
  %765 = vmatprep.subr.mxu0 0.0
  %766 = vmatpush1.msra.mxu0 %v34
  %767 = vmatprep.subr.mxu0 0.0
  %768 = vmatpush1.msra.mxu0 %v35
  %769 = vmatprep.subr.mxu0 0.0
  %770 = vmatpush1.msra.mxu0 %v36
  %771 = vmatprep.subr.mxu0 0.0
  %772 = vmatpush1.msra.mxu0 %v37
  %773 = vmatprep.subr.mxu0 0.0
  %774 = vmatpush1.msra.mxu0 %v38
  %775 = vmatprep.subr.mxu0 0.0
  %776 = vmatpush1.msra.mxu0 %v39
  %777 = vmatprep.subr.mxu0 0.0
  %778 = vmatpush1.msra.mxu0 %v40
  %779 = vmatprep.subr.mxu0 0.0
  %780 = vmatpush1.msra.mxu0 %v41
  %781 = vmatprep.subr.mxu0 0.0
  %782 = vmatpush1.msra.mxu0 %v42
  %783 = vmatprep.subr.mxu0 0.0
  %784 = vmatpush1.msra.mxu0 %v43
  %785 = vmatprep.subr.mxu0 0.0
  %786 = vmatpush1.msra.mxu0 %v44
  %787 = vmatprep.subr.mxu0 0.0
  %788 = vmatpush1.msra.mxu0 %v45
  %789 = vmatprep.subr.mxu0 0.0
  %790 = vmatpush1.msra.mxu0 %v46
  %791 = vmatprep.subr.mxu0 0.0
  %792 = vmatpush1.msra.mxu0 %v47
  %793 = vmatprep.subr.mxu0 0.0
  %794 = vmatpush1.msra.mxu0 %v48
  %795 = vmatprep.subr.mxu0 0.0
  %796 = vmatpush1.msra.mxu0 %v49
  %797 = vmatprep.subr.mxu0 0.0
  %798 = vmatpush1.msra.mxu0 0.0
  %799 = vmatprep.subr.mxu0 0.0
  %800 = vmatpush1.msra.mxu0 0.0
  %801 = vmatprep.subr.mxu0 0.0
  %802 = vmatpush1.msra.mxu0 0.0
  %803 = vmatprep.subr.mxu0 0.0
  %804 = vmatpush1.msra.mxu0 0.0
  %805 = vmatprep.subr.mxu0 0.0
  %806 = vmatpush1.msra.mxu0 0.0
  %807 = vmatprep.subr.mxu0 0.0
  %808 = vmatpush1.msra.mxu0 0.0
  %809 = vmatprep.subr.mxu0 0.0
  %810 = vmatpush1.msra.mxu0 0.0
  %811 = vmatprep.subr.mxu0 0.0
  %812 = vmatpush1.msra.mxu0 0.0
  %813 = vmatprep.subr.mxu0 0.0
  %814 = vmatpush1.msra.mxu0 0.0
  %815 = vmatprep.subr.mxu0 0.0
  %816 = vmatpush1.msra.mxu0 0.0
  %817 = vmatprep.subr.mxu0 0.0
  %818 = vmatpush1.msra.mxu0 0.0
  %819 = vmatprep.subr.mxu0 0.0
  %820 = vmatpush1.msra.mxu0 0.0
  %821 = vmatprep.subr.mxu0 0.0
  %822 = vmatpush1.msra.mxu0 0.0
  %823 = vmatprep.subr.mxu0 0.0
  %824 = vmatpush1.msra.mxu0 0.0
  %825 = vmatprep.subr.mxu0 0.0
  %826 = vmatpush1.msra.mxu0 0.0
  %827 = vmatprep.subr.mxu0 0.0
  %828 = vmatpush1.msra.mxu0 0.0
  %829 = vmatprep.mubr.f32.mxu0 0.0
  %830 = vmatmul.mubr.f32.gmra.mrb[0].mxu0 %v760
  %v831 = vpop.f32.mrb[0].mxu0
  %v832 = vadd.f32 0.0, %v831
  %v833 = vpop.f32.mrb[0].mxu0
  %834 = vmatprep.mubr.f32.mxu0 0.0
  %835 = vmatmul.mubr.f32.gmra.mrb[0].mxu0 %v761
  %v836 = vpop.f32.mrb[0].mxu0
  %v837 = vadd.f32 0.0, %v836
  %v838 = vpop.f32.mrb[0].mxu0
  %839 = vmatprep.mubr.f32.mxu0 0.0
  %840 = vmatmul.mubr.f32.gmra.mrb[0].mxu0 %v762
  %v841 = vpop.f32.mrb[0].mxu0
  %v842 = vadd.f32 0.0, %v841
  %v843 = vpop.f32.mrb[0].mxu0
  %844 = vmatprep.mubr.f32.mxu0 0.0
  %845 = vmatmul.mubr.f32.gmra.mrb[0].mxu0 %v763
  %v846 = vpop.f32.mrb[0].mxu0
  %v847 = vadd.f32 0.0, %v846
  %v848 = vpop.f32.mrb[0].mxu0
  %849 = vmatprep.mubr.f32.mxu0 0.0
  %850 = vmatmul.mubr.f32.gmra.mrb[0].mxu0 %v764
  %v851 = vpop.f32.mrb[0].mxu0
  %v852 = vadd.f32 0.0, %v851
  %v853 = vpop.f32.mrb[0].mxu0
  %854 = vdwg.mxu0
  %v855 = vadd.f32 %v832, %v837
  %v856 = vadd.f32 %v855, %v842
  %v857 = vadd.f32 %v856, %v847
  %v858 = vsel %vm147, %v852, 0.0
  %v859 = vadd.f32 %v857, %v858
  %v860 = vrot.slane %v859, 4
  %v861 = vadd.f32 %v859, %v860
  %v862 = vrot.slane %v861, 2
  %v863 = vadd.f32 %v861, %v862
  %v864 = vrot.slane %v863, 1
  %v865 = vadd.f32 %v863, %v864
  %v866 = vmul.f32 %v759, 0.001953125
  %v867 = vmul.f32 %v865, 0.001953125
  %v868 = vmul.f32 %v866, %v866
  %v869 = vsub.f32 %v867, %v868
  %v870 = vadd.f32 %v869, 1e-05
  %v871 = vrsqrt.pop %v870
  %v872 = vmul.f32 %v657, %v871
  %v873 = vmul.f32 %v866, %v872
  %v874 = vsub.f32 %v658, %v873
  %v875 = vlaneseq
  %v876 = vshrl.u32 %v875, 7
  %v877 = vsub.s32 0, %v876
  %v878 = vrot.slane %v872, %v877
  %v879 = vmul.f32 %v631, %v878
  %v880 = vmul.f32 %v634, %v878
  %v881 = vmul.f32 %v639, %v878
  %v882 = vmul.f32 %v642, %v878
  %v883 = vmul.f32 %v647, %v878
  %v884 = vlaneseq
  %v885 = vshrl.u32 %v884, 7
  %v886 = vsub.s32 0, %v885
  %v887 = vrot.slane %v874, %v886
  %v888 = vadd.f32 %v879, %v887
  %v889 = vadd.f32 %v880, %v887
  %v890 = vadd.f32 %v881, %v887
  %v891 = vadd.f32 %v882, %v887
  %v892 = vadd.f32 %v883, %v887
  %v893 = vmax.f32 %v888, 0.0
  %v894 = vmax.f32 %v889, 0.0
  %v895 = vmax.f32 %v890, 0.0
  %v896 = vmax.f32 %v891, 0.0
  %v897 = vmax.f32 %v892, 0.0
  %v898 = vmul.f32 %v893, %v297
  %v899 = vmul.f32 %v894, %v302
  %v900 = vmul.f32 %v895, %v307
  %v901 = vmul.f32 %v896, %v312
  %v902 = vmul.f32 %v897, %v317
  %903 = vst [vmem:[#allocation2 + $0x8] sm:$0xff] %v898
  %904 = vst [vmem:[#allocation2 + $0x10] sm:$0xff] %v899
  %905 = vst [vmem:[#allocation2 + $0x18] sm:$0xff] %v900
  %906 = vst [vmem:[#allocation2 + $0x20] sm:$0xff] %v901
  %907 = vst [vmem:[#allocation2 + $0x28] sm:$0xf] %v902
  %v908 = vld [vmem:[#allocation2 + $0x7] sm:$0xff]
  %v909 = vld [vmem:[#allocation2 + $0xf] sm:$0xff]
  %v910 = vld [vmem:[#allocation2 + $0x17] sm:$0xff]
  %v911 = vld [vmem:[#allocation2 + $0x1f] sm:$0xff]
  %v912 = vld [vmem:[#allocation2 + $0x27] sm:$0xf]
  %v913 = vld [vmem:[#allocation2 + $0x9] sm:$0xff]
  %v914 = vld [vmem:[#allocation2 + $0x11] sm:$0xff]
  %v915 = vld [vmem:[#allocation2 + $0x19] sm:$0xff]
  %v916 = vld [vmem:[#allocation2 + $0x21] sm:$0xff]
  %v917 = vld [vmem:[#allocation2 + $0x29] sm:$0xf]
  %v918 = vpack.c.bf16 %v909, %v908
  %v919 = vpack.c.bf16 %v899, %v898
  %v920 = vpack.c.bf16 %v914, %v913
  %v921 = vpack.c.bf16 %v911, %v910
  %v922 = vpack.c.bf16 %v901, %v900
  %v923 = vpack.c.bf16 %v916, %v915
  %v924 = vpack.c.bf16 %v912, %v912
  %v925 = vpack.c.bf16 %v902, %v902
  %v926 = vpack.c.bf16 %v917, %v917
  %v927 = vld [vmem:[%s5] sm:$0xf]
  %v928 = vld [vmem:[%s5 + $0x4] sm:$0xf]
  %v929 = vld [vmem:[%s5 + $0x8] sm:$0xf]
  %v930 = vld [vmem:[%s5 + $0xc] sm:$0xf]
  %v931 = vld [vmem:[%s5 + $0x10] sm:$0xf]
  %v932 = vld [vmem:[%s5 + $0x14] sm:$0xf]
  %v933 = vld [vmem:[%s5 + $0x18] sm:$0xf]
  %v934 = vld [vmem:[%s5 + $0x1c] sm:$0xf]
  %v935 = vld [vmem:[%s5 + $0x20] sm:$0xf]
  %v936 = vld [vmem:[%s5 + $0x24] sm:$0xf]
  %v937 = vld [vmem:[%s5 + $0x28] sm:$0xf]
  %v938 = vld [vmem:[%s5 + $0x2c] sm:$0xf]
  %v939 = vld [vmem:[%s5 + $0x30] sm:$0xf]
  %v940 = vld [vmem:[%s5 + $0x34] sm:$0xf]
  %v941 = vld [vmem:[%s5 + $0x38] sm:$0xf]
  %v942 = vld [vmem:[%s5 + $0x3c] sm:$0xf]
  %v943 = vld [vmem:[%s5 + $0x40] sm:$0xf]
  %v944 = vld [vmem:[%s5 + $0x44] sm:$0xf]
  %v945 = vld [vmem:[%s5 + $0x48] sm:$0xf]
  %v946 = vld [vmem:[%s5 + $0x4c] sm:$0xf]
  %v947 = vld [vmem:[%s5 + $0x50] sm:$0xf]
  %v948 = vld [vmem:[%s5 + $0x54] sm:$0xf]
  %v949 = vld [vmem:[%s5 + $0x58] sm:$0xf]
  %v950 = vld [vmem:[%s5 + $0x5c] sm:$0xf]
  %v951 = vld [vmem:[%s5 + $0x60] sm:$0xf]
  %v952 = vld [vmem:[%s5 + $0x64] sm:$0xf]
  %v953 = vld [vmem:[%s5 + $0x68] sm:$0xf]
  %v954 = vld [vmem:[%s5 + $0x6c] sm:$0xf]
  %v955 = vld [vmem:[%s5 + $0x70] sm:$0xf]
  %v956 = vld [vmem:[%s5 + $0x74] sm:$0xf]
  %v957 = vld [vmem:[%s5 + $0x78] sm:$0xf]
  %v958 = vld [vmem:[%s5 + $0x7c] sm:$0xf]
  %v959 = vld [vmem:[%s5 + $0x80] sm:$0xf]
  %v960 = vld [vmem:[%s5 + $0x84] sm:$0xf]
  %v961 = vld [vmem:[%s5 + $0x88] sm:$0xf]
  %v962 = vld [vmem:[%s5 + $0x8c] sm:$0xf]
  %v963 = vld [vmem:[%s5 + $0x90] sm:$0xf]
  %v964 = vld [vmem:[%s5 + $0x94] sm:$0xf]
  %v965 = vld [vmem:[%s5 + $0x98] sm:$0xf]
  %v966 = vld [vmem:[%s5 + $0x9c] sm:$0xf]
  %v967 = vld [vmem:[%s5 + $0xa0] sm:$0xf]
  %v968 = vld [vmem:[%s5 + $0xa4] sm:$0xf]
  %v969 = vld [vmem:[%s5 + $0xa8] sm:$0xf]
  %v970 = vld [vmem:[%s5 + $0xac] sm:$0xf]
  %v971 = vld [vmem:[%s5 + $0xb0] sm:$0xf]
  %v972 = vld [vmem:[%s5 + $0xb4] sm:$0xf]
  %v973 = vld [vmem:[%s5 + $0xb8] sm:$0xf]
  %v974 = vld [vmem:[%s5 + $0xbc] sm:$0xf]
  %v1023 = vunpack.c.l.b16 %v927
  %v1024 = vunpack.c.l.b16 %v928
  %v1025 = vunpack.c.l.b16 %v929
  %v1026 = vunpack.c.l.b16 %v930
  %v1027 = vunpack.c.l.b16 %v931
  %v1028 = vunpack.c.l.b16 %v932
  %v1029 = vunpack.c.l.b16 %v933
  %v1030 = vunpack.c.l.b16 %v934
  %v1031 = vunpack.c.l.b16 %v935
  %v1032 = vunpack.c.l.b16 %v936
  %v1033 = vunpack.c.l.b16 %v937
  %v1034 = vunpack.c.l.b16 %v938
  %v1035 = vunpack.c.l.b16 %v939
  %v1036 = vunpack.c.l.b16 %v940
  %v1037 = vunpack.c.l.b16 %v941
  %v1038 = vunpack.c.l.b16 %v942
  %v1039 = vunpack.c.l.b16 %v943
  %v1040 = vunpack.c.l.b16 %v944
  %v1041 = vunpack.c.l.b16 %v945
  %v1042 = vunpack.c.l.b16 %v946
  %v1043 = vunpack.c.l.b16 %v947
  %v1044 = vunpack.c.l.b16 %v948
  %v1045 = vunpack.c.l.b16 %v949
  %v1046 = vunpack.c.l.b16 %v950
  %v1047 = vunpack.c.l.b16 %v951
  %v1048 = vunpack.c.l.b16 %v952
  %v1049 = vunpack.c.l.b16 %v953
  %v1050 = vunpack.c.l.b16 %v954
  %v1051 = vunpack.c.l.b16 %v955
  %v1052 = vunpack.c.l.b16 %v956
  %v1053 = vunpack.c.l.b16 %v957
  %v1054 = vunpack.c.l.b16 %v958
  %v1055 = vunpack.c.l.b16 %v959
  %v1056 = vunpack.c.l.b16 %v960
  %v1057 = vunpack.c.l.b16 %v961
  %v1058 = vunpack.c.l.b16 %v962
  %v1059 = vunpack.c.l.b16 %v963
  %v1060 = vunpack.c.l.b16 %v964
  %v1061 = vunpack.c.l.b16 %v965
  %v1062 = vunpack.c.l.b16 %v966
  %v1063 = vunpack.c.l.b16 %v967
  %v1064 = vunpack.c.l.b16 %v968
  %v1065 = vunpack.c.l.b16 %v969
  %v1066 = vunpack.c.l.b16 %v970
  %v1067 = vunpack.c.l.b16 %v971
  %v1068 = vunpack.c.l.b16 %v972
  %v1069 = vunpack.c.l.b16 %v973
  %v1070 = vunpack.c.l.b16 %v974
  %v1071 = vpack.c.b16 %v1024, %v1023
  %v1072 = vpack.c.b16 %v1026, %v1025
  %v1073 = vpack.c.b16 %v1028, %v1027
  %v1074 = vpack.c.b16 %v1030, %v1029
  %v1075 = vpack.c.b16 %v1032, %v1031
  %v1076 = vpack.c.b16 %v1034, %v1033
  %v1077 = vpack.c.b16 %v1036, %v1035
  %v1078 = vpack.c.b16 %v1038, %v1037
  %v1079 = vpack.c.b16 %v1040, %v1039
  %v1080 = vpack.c.b16 %v1042, %v1041
  %v1081 = vpack.c.b16 %v1044, %v1043
  %v1082 = vpack.c.b16 %v1046, %v1045
  %v1083 = vpack.c.b16 %v1048, %v1047
  %v1084 = vpack.c.b16 %v1050, %v1049
  %v1085 = vpack.c.b16 %v1052, %v1051
  %v1086 = vpack.c.b16 %v1054, %v1053
  %v1087 = vpack.c.b16 %v1056, %v1055
  %v1088 = vpack.c.b16 %v1058, %v1057
  %v1089 = vpack.c.b16 %v1060, %v1059
  %v1090 = vpack.c.b16 %v1062, %v1061
  %v1091 = vpack.c.b16 %v1064, %v1063
  %v1092 = vpack.c.b16 %v1066, %v1065
  %v1093 = vpack.c.b16 %v1068, %v1067
  %v1094 = vpack.c.b16 %v1070, %v1069
  %1119 = vmatprep.subr.bf16.mxu0 0
  %1120 = vmatpush1.bf16.msra.mxu0 %v1071
  %1121 = vmatprep.subr.bf16.mxu0 0
  %1122 = vmatpush1.bf16.msra.mxu0 %v1072
  %1123 = vmatprep.subr.bf16.mxu0 0
  %1124 = vmatpush1.bf16.msra.mxu0 %v1073
  %1125 = vmatprep.subr.bf16.mxu0 0
  %1126 = vmatpush1.bf16.msra.mxu0 %v1074
  %1127 = vmatprep.subr.bf16.mxu0 0
  %1128 = vmatpush1.bf16.msra.mxu0 %v1075
  %1129 = vmatprep.subr.bf16.mxu0 0
  %1130 = vmatpush1.bf16.msra.mxu0 %v1076
  %1131 = vmatprep.subr.bf16.mxu0 0
  %1132 = vmatpush1.bf16.msra.mxu0 %v1077
  %1133 = vmatprep.subr.bf16.mxu0 0
  %1134 = vmatpush1.bf16.msra.mxu0 %v1078
  %1135 = vmatprep.subr.bf16.mxu0 0
  %1136 = vmatpush1.bf16.msra.mxu0 %v1079
  %1137 = vmatprep.subr.bf16.mxu0 0
  %1138 = vmatpush1.bf16.msra.mxu0 %v1080
  %1139 = vmatprep.subr.bf16.mxu0 0
  %1140 = vmatpush1.bf16.msra.mxu0 %v1081
  %1141 = vmatprep.subr.bf16.mxu0 0
  %1142 = vmatpush1.bf16.msra.mxu0 %v1082
  %1143 = vmatprep.subr.bf16.mxu0 0
  %1144 = vmatpush1.bf16.msra.mxu0 %v1083
  %1145 = vmatprep.subr.bf16.mxu0 0
  %1146 = vmatpush1.bf16.msra.mxu0 %v1084
  %1147 = vmatprep.subr.bf16.mxu0 0
  %1148 = vmatpush1.bf16.msra.mxu0 %v1085
  %1149 = vmatprep.subr.bf16.mxu0 0
  %1150 = vmatpush1.bf16.msra.mxu0 %v1086
  %1151 = vmatprep.mubr.bf16.mxu0 %v919
  %1152 = vmatmul.mubr.bf16.gmra.mrb[0].mxu0 %v918
  %v1153 = vpop.f32.mrb[0].mxu0
  %v1154 = vadd.f32 %v24, %v1153
  %v1155 = vpop.f32.mrb[0].mxu0
  %v1156 = vpop.f32.mrb[0].mxu0
  %v1157 = vadd.f32 %v25, %v1156
  %v1158 = vpop.f32.mrb[0].mxu0
  %1159 = vmatprep.mubr.bf16.mxu0 %v922
  %1160 = vmatmul.mubr.bf16.gmra.mrb[0].mxu0 %v921
  %v1161 = vpop.f32.mrb[0].mxu0
  %v1162 = vadd.f32 %v26, %v1161
  %v1163 = vpop.f32.mrb[0].mxu0
  %v1164 = vpop.f32.mrb[0].mxu0
  %v1165 = vadd.f32 %v27, %v1164
  %v1166 = vpop.f32.mrb[0].mxu0
  %1167 = vmatprep.mubr.bf16.mxu0 %v925
  %1168 = vmatmul.mubr.bf16.gmra.mrb[0].mxu0 %v924
  %v1169 = vpop.f32.mrb[0].mxu0
  %v1170 = vadd.f32 %v28, %v1169
  %v1171 = vpop.f32.mrb[0].mxu0
  %v1172 = vpop.f32.mrb[0].mxu0
  %v1173 = vpop.f32.mrb[0].mxu0
  %1174 = vdwg.mxu0
  %1175 = vmatprep.subr.bf16.mxu0 0
  %1176 = vmatpush1.bf16.msra.mxu0 %v1087
  %1177 = vmatprep.subr.bf16.mxu0 0
  %1178 = vmatpush1.bf16.msra.mxu0 %v1088
  %1179 = vmatprep.subr.bf16.mxu0 0
  %1180 = vmatpush1.bf16.msra.mxu0 %v1089
  %1181 = vmatprep.subr.bf16.mxu0 0
  %1182 = vmatpush1.bf16.msra.mxu0 %v1090
  %1183 = vmatprep.subr.bf16.mxu0 0
  %1184 = vmatpush1.bf16.msra.mxu0 %v1091
  %1185 = vmatprep.subr.bf16.mxu0 0
  %1186 = vmatpush1.bf16.msra.mxu0 %v1092
  %1187 = vmatprep.subr.bf16.mxu0 0
  %1188 = vmatpush1.bf16.msra.mxu0 %v1093
  %1189 = vmatprep.subr.bf16.mxu0 0
  %1190 = vmatpush1.bf16.msra.mxu0 %v1094
  %1191 = vmatprep.subr.bf16.mxu0 0
  %1192 = vmatpush1.bf16.msra.mxu0 0
  %1193 = vmatprep.subr.bf16.mxu0 0
  %1194 = vmatpush1.bf16.msra.mxu0 0
  %1195 = vmatprep.subr.bf16.mxu0 0
  %1196 = vmatpush1.bf16.msra.mxu0 0
  %1197 = vmatprep.subr.bf16.mxu0 0
  %1198 = vmatpush1.bf16.msra.mxu0 0
  %1199 = vmatprep.subr.bf16.mxu0 0
  %1200 = vmatpush1.bf16.msra.mxu0 0
  %1201 = vmatprep.subr.bf16.mxu0 0
  %1202 = vmatpush1.bf16.msra.mxu0 0
  %1203 = vmatprep.subr.bf16.mxu0 0
  %1204 = vmatpush1.bf16.msra.mxu0 0
  %1205 = vmatprep.subr.bf16.mxu0 0
  %1206 = vmatpush1.bf16.msra.mxu0 0
  %1207 = vmatprep.mubr.bf16.mxu0 0
  %1208 = vmatmul.mubr.bf16.gmra.mrb[0].mxu0 %v920
  %v1209 = vpop.f32.mrb[0].mxu0
  %v1210 = vadd.f32 %v1154, %v1209
  %v1211 = vpop.f32.mrb[0].mxu0
  %v1212 = vpop.f32.mrb[0].mxu0
  %v1213 = vadd.f32 %v1157, %v1212
  %v1214 = vpop.f32.mrb[0].mxu0
  %1215 = vmatprep.mubr.bf16.mxu0 0
  %1216 = vmatmul.mubr.bf16.gmra.mrb[0].mxu0 %v923
  %v1217 = vpop.f32.mrb[0].mxu0
  %v1218 = vadd.f32 %v1162, %v1217
  %v1219 = vpop.f32.mrb[0].mxu0
  %v1220 = vpop.f32.mrb[0].mxu0
  %v1221 = vadd.f32 %v1165, %v1220
  %v1222 = vpop.f32.mrb[0].mxu0
  %1223 = vmatprep.mubr.bf16.mxu0 0
  %1224 = vmatmul.mubr.bf16.gmra.mrb[0].mxu0 %v926
  %v1225 = vpop.f32.mrb[0].mxu0
  %v1226 = vadd.f32 %v1170, %v1225
  %v1227 = vpop.f32.mrb[0].mxu0
  %v1228 = vpop.f32.mrb[0].mxu0
  %v1229 = vpop.f32.mrb[0].mxu0
  %1230 = vdwg.mxu0
  %1231 = vst [vmem:[%s6] sm:$0xff] %v1210
  %1232 = vst [vmem:[%s6 + $0x8] sm:$0xff] %v1213
  %1233 = vst [vmem:[%s6 + $0x10] sm:$0xff] %v1218
  %1234 = vst [vmem:[%s6 + $0x18] sm:$0xff] %v1221
  %1235 = vst [vmem:[%s6 + $0x20] sm:$0xf] %v1226
  // Predicated region
  $region26: #{preact_resnet_block.1} parent=0 // pred_check
    _
  $region27: #{preact_resnet_block.1} parent=0 // pred_check_branch
    %1237 = sbr.rel (0) target = $region29
  $region28: #{preact_resnet_block.1} parent=0 // pred_region
    _
  $region29: #{preact_resnet_block.1} parent=0 // pred_fallthru
    _
  // Predicated region
  $region30: #{preact_resnet_block.1} parent=0 // pred_check
    _
  $region31: #{preact_resnet_block.1} parent=0 // pred_check_branch
    %1239 = sbr.rel (0) target = $region33
  $region32: #{preact_resnet_block.1} parent=0 // pred_region
    _
  $region33: #{preact_resnet_block.1} parent=0 // pred_fallthru
    _

</llo_original>
